<compile_context>
chip_gen: v6e
topology: v6e:2x2x1
jax: 0.10.0
libtpu: 0.0.40
codegen_flags: <defaults>
</compile_context>

<pallas_src>
import functools

import jax
import jax.numpy as jnp
from jax.experimental import pallas as pl
from jax.experimental.pallas import tpu as pltpu

_LANE = 128
_SUBLANE = 8


def _rup(n, m):
    return ((n + m - 1) // m) * m


def _actor_kernel(x_ref, w_ref, b_ref, out_ref, *, dims, action_ub):
    d_in_p, h1_p, h2_p, out_p = dims

    # Static, lane/sublane-aligned slices of the packed weight slab
    # (all offsets are multiples of 128 -> no (8,128) tile-crossing copies).
    w1 = w_ref[0:d_in_p, 0:h1_p]
    w2 = w_ref[d_in_p:d_in_p + h1_p, 0:h2_p]
    wmu = w_ref[d_in_p + h1_p:d_in_p + h1_p + h2_p, 0:out_p]

    b = b_ref[...]                       # (8, Np) f32; rows 0..2 hold biases
    b1 = b[0:1, 0:h1_p]
    b2 = b[1:2, 0:h2_p]
    bmu = b[2:3, 0:out_p]

    x = x_ref[...]

    # Layer 1: Linear + ReLU (MXU matmul, f32 accumulation).
    h1 = jnp.dot(x, w1, preferred_element_type=jnp.float32)
    h1 = jnp.maximum(h1 + b1, 0.0)

    # Layer 2: Linear + ReLU (intermediates never leave VMEM, kept in f32).
    h2 = jnp.dot(h1, w2.astype(jnp.float32), preferred_element_type=jnp.float32)
    h2 = jnp.maximum(h2 + b2, 0.0)

    # mu head: Linear + tanh, scaled by action upper bound.
    mu = jnp.dot(h2, wmu.astype(jnp.float32), preferred_element_type=jnp.float32)
    mu = jnp.tanh(mu + bmu) * action_ub

    out_ref[...] = mu.astype(out_ref.dtype)


def pack_actor_params(params, param_dtype=jnp.float32):
    """Pack 3 weights + 3 biases into two 128-lane-padded slabs (two DMAs)."""
    w1, b1 = params["w1"], params["b1"]
    w2, b2 = params["w2"], params["b2"]
    wmu, bmu = params["wmu"], params["bmu"]

    d_in, h1 = w1.shape
    _, h2 = w2.shape
    _, d_out = wmu.shape

    d_in_p = _rup(d_in, _LANE)
    h1_p = _rup(h1, _LANE)
    h2_p = _rup(h2, _LANE)
    out_p = _rup(d_out, _LANE)
    n_cols = max(h1_p, h2_p, out_p)

    def pad2(a, rows, cols):
        return jnp.pad(a, ((0, rows - a.shape[0]), (0, cols - a.shape[1])))

    # Zero-padded columns/rows guarantee the padded hidden/output units stay
    # exactly zero through ReLU/tanh and never leak into real outputs.
    w_packed = jnp.concatenate(
        [pad2(w1, d_in_p, n_cols),
         pad2(w2, h1_p, n_cols),
         pad2(wmu, h2_p, n_cols)], axis=0).astype(param_dtype)

    b_packed = jnp.zeros((_SUBLANE, n_cols), jnp.float32)
    b_packed = b_packed.at[0, :h1].set(b1.reshape(-1).astype(jnp.float32))
    b_packed = b_packed.at[1, :h2].set(b2.reshape(-1).astype(jnp.float32))
    b_packed = b_packed.at[2, :d_out].set(bmu.reshape(-1).astype(jnp.float32))

    return {
        "w_packed": w_packed,
        "b_packed": b_packed,
        "dims": (d_in, h1, h2, d_out),
        "padded_dims": (d_in_p, h1_p, h2_p, out_p),
    }


def actor_forward(x, packed, action_ub, *, block_batch=1024):
    """x: (B, input_dims). packed: output of pack_actor_params."""
    d_in, h1, h2, d_out = packed["dims"]
    d_in_p, h1_p, h2_p, out_p = packed["padded_dims"]
    w_packed = packed["w_packed"]
    b_packed = packed["b_packed"]
    n_rows, n_cols = w_packed.shape

    batch = x.shape[0]
    # Batch tile: multiple of 8 sublanes, capped so double-buffered in/out
    # tiles + the weight slab stay far under v7x's 32 MiB scoped VMEM default.
    tb = min(block_batch, _rup(batch, _SUBLANE))
    tb = _rup(tb, _SUBLANE)
    batch_p = _rup(batch, tb)

    x_p = jnp.pad(x.astype(w_packed.dtype),
                  ((0, batch_p - batch), (0, d_in_p - d_in)))

    kernel = functools.partial(_actor_kernel,
                               dims=(d_in_p, h1_p, h2_p, out_p),
                               action_ub=float(action_ub))

    flops = 2 * batch_p * (d_in_p * h1_p + h1_p * h2_p + h2_p * out_p)
    bytes_accessed = (x_p.size * x_p.dtype.itemsize
                      + w_packed.size * w_packed.dtype.itemsize
                      + b_packed.size * b_packed.dtype.itemsize
                      + batch_p * out_p * 4)
    cost = pl.CostEstimate(flops=flops,
                           transcendentals=batch_p * out_p,
                           bytes_accessed=bytes_accessed)

    out_padded = pl.pallas_call(
        kernel,
        out_shape=jax.ShapeDtypeStruct((batch_p, out_p), jnp.float32),
        grid=(batch_p // tb,),
        in_specs=[
            pl.BlockSpec((tb, d_in_p), lambda i: (i, 0)),        # batch-tiled x
            pl.BlockSpec((n_rows, n_cols), lambda i: (0, 0)),    # weight slab (grid-invariant)
            pl.BlockSpec((_SUBLANE, n_cols), lambda i: (0, 0)),  # bias slab (grid-invariant)
        ],
        out_specs=pl.BlockSpec((tb, out_p), lambda i: (i, 0)),
        compiler_params=pltpu.CompilerParams(
            dimension_semantics=("parallel",)),
        cost_estimate=cost,
    )(x_p, w_packed, b_packed)

    return out_padded[:batch, :d_out]


def init_actor_params(key, input_dims, layer1_dims, layer2_dims, output_dims):
    """Deterministic re-implementation of init_layer_weights (uniform(-w, w))."""
    ks = jax.random.split(key, 6)

    def uniform(k, shape, w):
        return jax.random.uniform(k, shape, jnp.float32, minval=-w, maxval=w)

    # PyTorch: weight.data.size()[0] == out_features for nn.Linear
    w1_scale = 1.0 / jnp.sqrt(float(layer1_dims))
    w2_scale = 1.0 / jnp.sqrt(float(layer2_dims))
    mu_scale = 0.003

    return {
        "w1": uniform(ks[0], (input_dims, layer1_dims), w1_scale),
        "b1": uniform(ks[1], (1, layer1_dims), w1_scale),
        "w2": uniform(ks[2], (layer1_dims, layer2_dims), w2_scale),
        "b2": uniform(ks[3], (1, layer2_dims), w2_scale),
        "wmu": uniform(ks[4], (layer2_dims, output_dims), mu_scale),
        "bmu": uniform(ks[5], (1, output_dims), mu_scale),
    }


def actor_forward_ref(x, params, action_ub):
    """Pure-JAX reference for correctness check."""
    h1 = jnp.maximum(x @ params["w1"] + params["b1"], 0.0)
    h2 = jnp.maximum(h1 @ params["w2"] + params["b2"], 0.0)
    return jnp.tanh(h2 @ params["wmu"] + params["bmu"]) * action_ub


if __name__ == "__main__":
    # Small shapes consistent with the module's Linear stack.
    batch = 2
    input_dims = 8
    layer1_dims = 32
    layer2_dims = 32
    output_dims = 4
    action_ub = 2.0

    key = jax.random.PRNGKey(0)
    k_params, k_x, k_x2 = jax.random.split(key, 3)

    params = init_actor_params(k_params, input_dims, layer1_dims,
                               layer2_dims, output_dims)
    packed = pack_actor_params(params, jnp.float32)

    # Tiny batch (single tile).
    x = jax.random.normal(k_x, (batch, input_dims), dtype=jnp.float32)
    out = jax.block_until_ready(actor_forward(x, packed, action_ub))
    ref = actor_forward_ref(x, params, action_ub)
    assert out.shape == (batch, output_dims)
    assert jnp.allclose(out, ref, atol=1e-5, rtol=1e-5)

    # Larger batch exercising the batch grid (grid=(3,), padded last tile).
    x_big = jax.random.normal(k_x2, (300, input_dims), dtype=jnp.float32)
    out_big = jax.block_until_ready(
        actor_forward(x_big, packed, action_ub, block_batch=128))
    ref_big = actor_forward_ref(x_big, params, action_ub)
    assert out_big.shape == (300, output_dims)
    assert jnp.allclose(out_big, ref_big, atol=1e-5, rtol=1e-5)

    # bf16 DMA-operand path (halves HBM traffic for x/W; math stays f32).
    packed_bf16 = pack_actor_params(params, jnp.bfloat16)
    out_bf16 = jax.block_until_ready(actor_forward(x_big, packed_bf16, action_ub))
    assert out_bf16.shape == (300, output_dims)
    assert jnp.allclose(out_bf16, ref_big, atol=5e-2, rtol=5e-2)

    print("KERNEL_OK")
</pallas_src>

<mosaic_0001>
module attributes {stable_mosaic.version = 11 : i64} {
  func.func @_actor_kernel(%arg0: i32, %arg1: memref<8x128xf32, #tpu.memory_space<vmem>>, %arg2: memref<384x128xf32, #tpu.memory_space<vmem>>, %arg3: memref<8x128xf32, #tpu.memory_space<vmem>>, %arg4: memref<8x128xf32, #tpu.memory_space<vmem>>) attributes {dimension_semantics = [#tpu.dimension_semantics<parallel>], iteration_bounds = array<i64: 1>, scalar_prefetch = 0 : i64, scratch_operands = 0 : i64, tpu.core_type = #tpu.core_type<tc>, window_params = [{transform_indices = @transform_0, window_bounds = array<i64: 8, 128>}, {pipeline_mode = #tpu.pipeline_mode<synchronous>, transform_indices = @transform_1, window_bounds = array<i64: 384, 128>}, {pipeline_mode = #tpu.pipeline_mode<synchronous>, transform_indices = @transform_2, window_bounds = array<i64: 8, 128>}, {transform_indices = @transform_3, window_bounds = array<i64: 8, 128>}]} {
    %c0 = arith.constant 0 : index
    %c0_0 = arith.constant 0 : index
    %0 = vector.load %arg2[%c0, %c0_0] : memref<384x128xf32, #tpu.memory_space<vmem>>, vector<128x128xf32>
    %c128 = arith.constant 128 : index
    %c0_1 = arith.constant 0 : index
    %1 = vector.load %arg2[%c128, %c0_1] : memref<384x128xf32, #tpu.memory_space<vmem>>, vector<128x128xf32>
    %c256 = arith.constant 256 : index
    %c0_2 = arith.constant 0 : index
    %2 = vector.load %arg2[%c256, %c0_2] : memref<384x128xf32, #tpu.memory_space<vmem>>, vector<128x128xf32>
    %c0_3 = arith.constant 0 : index
    %c0_4 = arith.constant 0 : index
    %3 = vector.load %arg3[%c0_3, %c0_4] : memref<8x128xf32, #tpu.memory_space<vmem>>, vector<8x128xf32>
    %4 = vector.extract_strided_slice %3 {offsets = [0, 0], sizes = [1, 128], strides = [1, 1]} : vector<8x128xf32> to vector<1x128xf32>
    %5 = vector.extract_strided_slice %3 {offsets = [1, 0], sizes = [1, 128], strides = [1, 1]} : vector<8x128xf32> to vector<1x128xf32>
    %6 = vector.extract_strided_slice %3 {offsets = [2, 0], sizes = [1, 128], strides = [1, 1]} : vector<8x128xf32> to vector<1x128xf32>
    %c0_5 = arith.constant 0 : index
    %c0_6 = arith.constant 0 : index
    %7 = vector.load %arg1[%c0_5, %c0_6] : memref<8x128xf32, #tpu.memory_space<vmem>>, vector<8x128xf32>
    %cst = arith.constant dense<0.000000e+00> : vector<8x128xf32>
    %8 = tpu.matmul %7, %0, %cst {dimension_numbers = #tpu.dot_dimension_numbers<[1], [0], [0], [1], [0, 0, 1, 1], [], []>} : vector<8x128xf32>, vector<128x128xf32>, vector<8x128xf32> -> vector<8x128xf32>
    %9 = vector.broadcast %4 : vector<1x128xf32> to vector<8x128xf32>
    %10 = arith.addf %8, %9 : vector<8x128xf32>
    %cst_7 = arith.constant 0.000000e+00 : f32
    %11 = vector.broadcast %cst_7 : f32 to vector<8x128xf32>
    %12 = arith.maximumf %10, %11 : vector<8x128xf32>
    %cst_8 = arith.constant dense<0.000000e+00> : vector<8x128xf32>
    %13 = tpu.matmul %12, %1, %cst_8 {dimension_numbers = #tpu.dot_dimension_numbers<[1], [0], [0], [1], [0, 0, 1, 1], [], []>} : vector<8x128xf32>, vector<128x128xf32>, vector<8x128xf32> -> vector<8x128xf32>
    %14 = vector.broadcast %5 : vector<1x128xf32> to vector<8x128xf32>
    %15 = arith.addf %13, %14 : vector<8x128xf32>
    %cst_9 = arith.constant 0.000000e+00 : f32
    %16 = vector.broadcast %cst_9 : f32 to vector<8x128xf32>
    %17 = arith.maximumf %15, %16 : vector<8x128xf32>
    %cst_10 = arith.constant dense<0.000000e+00> : vector<8x128xf32>
    %18 = tpu.matmul %17, %2, %cst_10 {dimension_numbers = #tpu.dot_dimension_numbers<[1], [0], [0], [1], [0, 0, 1, 1], [], []>} : vector<8x128xf32>, vector<128x128xf32>, vector<8x128xf32> -> vector<8x128xf32>
    %19 = vector.broadcast %6 : vector<1x128xf32> to vector<8x128xf32>
    %20 = arith.addf %18, %19 : vector<8x128xf32>
    %21 = math.tanh %20 : vector<8x128xf32>
    %cst_11 = arith.constant 2.000000e+00 : f32
    %22 = vector.broadcast %cst_11 : f32 to vector<8x128xf32>
    %23 = arith.mulf %21, %22 : vector<8x128xf32>
    %c0_12 = arith.constant 0 : index
    %c0_13 = arith.constant 0 : index
    %24 = vector.load %arg4[%c0_12, %c0_13] : memref<8x128xf32, #tpu.memory_space<vmem>>, vector<8x128xf32>
    tpu.vector_store %arg4[%c0_12, %c0_13], %23 {strides = array<i32>} : memref<8x128xf32, #tpu.memory_space<vmem>>, vector<8x128xf32>,
    return
  }
  func.func @transform_0(%arg0: i32) -> (i32, i32) {
    %c0_i32 = arith.constant 0 : i32
    %c0_i32_0 = arith.constant 0 : i32
    return %arg0, %c0_i32 : i32, i32
  }
  func.func @transform_1(%arg0: i32) -> (i32, i32) {
    %c0_i32 = arith.constant 0 : i32
    %c0_i32_0 = arith.constant 0 : i32
    %c0_i32_1 = arith.constant 0 : i32
    return %c0_i32, %c0_i32_0 : i32, i32
  }
  func.func @transform_2(%arg0: i32) -> (i32, i32) {
    %c0_i32 = arith.constant 0 : i32
    %c0_i32_0 = arith.constant 0 : i32
    %c0_i32_1 = arith.constant 0 : i32
    return %c0_i32, %c0_i32_0 : i32, i32
  }
  func.func @transform_3(%arg0: i32) -> (i32, i32) {
    %c0_i32 = arith.constant 0 : i32
    %c0_i32_0 = arith.constant 0 : i32
    return %arg0, %c0_i32 : i32, i32
  }
}

</mosaic_0001>

<llo_original>
// kernel: tpu_custom_call.1
$region0: #{tpu_custom_call.1}
  #allocation0 [shape = 'u32[]', space=smem, size = 0x4, offset = 0x4, fixed_abs, tag = 'smem constant byte address 0x4 - core index']
  #allocation1 [shape = 'u32[144,128]{1,0:T(1,128)}', space=vmem, size = 0x12000, scoped, tag = 'internal scratch']
  %s0 = inlined_call_operand.hbm [shape: f32[8,128], index: 0, kind: input, shape index: {}]
  %s1 = inlined_call_operand.hbm [shape: f32[384,128], index: 1, kind: input, shape index: {}]
  %s2 = inlined_call_operand.hbm [shape: f32[8,128], index: 2, kind: input, shape index: {}]
  %s3 = inlined_call_operand.hbm [shape: f32[8,128], index: 3, kind: output, shape index: {}]
  %s4 = sld [smem:[#allocation0]]
  $region34: #{tpu_custom_call.1} parent=0
    _
  %s6 = ssub.s32 1, %s4
  %s7 = scalar_select 0, %s6, %s4
  $region1: #{tpu_custom_call.1} parent=0
    #allocation2 [shape = 'u8[4096]{0}', space=vmem, size = 0x1000, scoped, tag = 'input window, operand 0, single buffered']
    #allocation3 [shape = 's32[1]{0}', space=sflag, size = 0x4, scoped, tag = 'scoped memory for tpu_custom_call.1']
    #allocation4 [shape = 's32[1]{0}', space=sflag, size = 0x4, scoped, tag = 'scoped memory for tpu_custom_call.1']
    #allocation5 [shape = 'u8[196608]{0}', space=vmem, size = 0x30000, scoped, tag = 'input window, operand 1, single buffered']
    #allocation6 [shape = 's32[1]{0}', space=sflag, size = 0x4, scoped, tag = 'scoped memory for tpu_custom_call.1']
    #allocation7 [shape = 'u8[4096]{0}', space=vmem, size = 0x1000, scoped, tag = 'input window, operand 2, single buffered']
    #allocation8 [shape = 'u8[4096]{0}', space=vmem, size = 0x1000, scoped, tag = 'output window, operand 0, single buffered']
    %8 = vsyncpa [#allocation3], 0
    %9 = vsyncpa [#allocation6], 0
    %10 = vsyncpa [#allocation4], 0
    // Predicated region
    $region2: #{tpu_custom_call.1} parent=1 // pred_check
      _
    $region3: #{tpu_custom_call.1} parent=1 // pred_check_branch
      %12 = sbr.rel (0) target = $region5
    $region4: #{tpu_custom_call.1} parent=1 // pred_region
      %s14 = ssub.s32 128, 128
      %15 = vsyncadd [#allocation3], %s14
      %s17 = sshll.u32 [#allocation2], 4
      %s18 = int_to_ptr.vmem [resolvable:$true] %s17
      %20 = dma.hbm_to_vmem [thread:$0]  %s0, 128, %s18, [#allocation3]
    $region5: #{tpu_custom_call.1} parent=1 // pred_fallthru
      _
    // Predicated region
    $region6: #{tpu_custom_call.1} parent=1 // pred_check
      _
    $region7: #{tpu_custom_call.1} parent=1 // pred_check_branch
      %22 = sbr.rel (0) target = $region9
    $region8: #{tpu_custom_call.1} parent=1 // pred_region
      %s24 = ssub.s32 6144, 6144
      %25 = vsyncadd [#allocation6], %s24
      %s26 = sshll.u32 [#allocation5], 4
      %s27 = int_to_ptr.vmem [resolvable:$true] %s26
      %32 = dma.hbm_to_vmem [thread:$0]  %s1, 6144, %s27, [#allocation6], 128, 128, 8
    $region9: #{tpu_custom_call.1} parent=1 // pred_fallthru
      _
    // Predicated region
    $region10: #{tpu_custom_call.1} parent=1 // pred_check
      _
    $region11: #{tpu_custom_call.1} parent=1 // pred_check_branch
      %34 = sbr.rel (0) target = $region13
    $region12: #{tpu_custom_call.1} parent=1 // pred_region
      %s36 = ssub.s32 128, 128
      %37 = vsyncadd [#allocation6], %s36
      %s39 = sshll.u32 [#allocation7], 4
      %s40 = int_to_ptr.vmem [resolvable:$true] %s39
      %42 = dma.hbm_to_vmem [thread:$0]  %s2, 128, %s40, [#allocation6]
    $region13: #{tpu_custom_call.1} parent=1 // pred_fallthru
      _
    // Predicated region
    $region14: #{tpu_custom_call.1} parent=1 // pred_check
      _
    $region15: #{tpu_custom_call.1} parent=1 // pred_check_branch
      %44 = sbr.rel (0) target = $region17
    $region16: #{tpu_custom_call.1} parent=1 // pred_region
      %45 = dma.done [#allocation3], 128
    $region17: #{tpu_custom_call.1} parent=1 // pred_fallthru
      _
    // Predicated region
    $region18: #{tpu_custom_call.1} parent=1 // pred_check
      _
    $region19: #{tpu_custom_call.1} parent=1 // pred_check_branch
      %47 = sbr.rel (0) target = $region21
    $region20: #{tpu_custom_call.1} parent=1 // pred_region
      %48 = dma.done [#allocation6], 6144
    $region21: #{tpu_custom_call.1} parent=1 // pred_fallthru
      _
    // Predicated region
    $region22: #{tpu_custom_call.1} parent=1 // pred_check
      _
    $region23: #{tpu_custom_call.1} parent=1 // pred_check_branch
      %50 = sbr.rel (0) target = $region25
    $region24: #{tpu_custom_call.1} parent=1 // pred_region
      %51 = dma.done [#allocation6], 128
    $region25: #{tpu_custom_call.1} parent=1 // pred_fallthru
      _
    %v52 = vld [vmem:[#allocation5] sm:$0xff]
    %v53 = vld [vmem:[#allocation5 + $0x8] sm:$0xff]
    %v54 = vld [vmem:[#allocation5 + $0x10] sm:$0xff]
    %v55 = vld [vmem:[#allocation5 + $0x18] sm:$0xff]
    %v56 = vld [vmem:[#allocation5 + $0x20] sm:$0xff]
    %v57 = vld [vmem:[#allocation5 + $0x28] sm:$0xff]
    %v58 = vld [vmem:[#allocation5 + $0x30] sm:$0xff]
    %v59 = vld [vmem:[#allocation5 + $0x38] sm:$0xff]
    %v60 = vld [vmem:[#allocation5 + $0x40] sm:$0xff]
    %v61 = vld [vmem:[#allocation5 + $0x48] sm:$0xff]
    %v62 = vld [vmem:[#allocation5 + $0x50] sm:$0xff]
    %v63 = vld [vmem:[#allocation5 + $0x58] sm:$0xff]
    %v64 = vld [vmem:[#allocation5 + $0x60] sm:$0xff]
    %v65 = vld [vmem:[#allocation5 + $0x68] sm:$0xff]
    %v66 = vld [vmem:[#allocation5 + $0x70] sm:$0xff]
    %v67 = vld [vmem:[#allocation5 + $0x78] sm:$0xff]
    %v68 = vld [vmem:[#allocation5 + $0x80] sm:$0xff]
    %v69 = vld [vmem:[#allocation5 + $0x88] sm:$0xff]
    %v70 = vld [vmem:[#allocation5 + $0x90] sm:$0xff]
    %v71 = vld [vmem:[#allocation5 + $0x98] sm:$0xff]
    %v72 = vld [vmem:[#allocation5 + $0xa0] sm:$0xff]
    %v73 = vld [vmem:[#allocation5 + $0xa8] sm:$0xff]
    %v74 = vld [vmem:[#allocation5 + $0xb0] sm:$0xff]
    %v75 = vld [vmem:[#allocation5 + $0xb8] sm:$0xff]
    %v76 = vld [vmem:[#allocation5 + $0xc0] sm:$0xff]
    %v77 = vld [vmem:[#allocation5 + $0xc8] sm:$0xff]
    %v78 = vld [vmem:[#allocation5 + $0xd0] sm:$0xff]
    %v79 = vld [vmem:[#allocation5 + $0xd8] sm:$0xff]
    %v80 = vld [vmem:[#allocation5 + $0xe0] sm:$0xff]
    %v81 = vld [vmem:[#allocation5 + $0xe8] sm:$0xff]
    %v82 = vld [vmem:[#allocation5 + $0xf0] sm:$0xff]
    %v83 = vld [vmem:[#allocation5 + $0xf8] sm:$0xff]
    %v84 = vld [vmem:[#allocation5 + $0x100] sm:$0xff]
    %v85 = vld [vmem:[#allocation5 + $0x108] sm:$0xff]
    %v86 = vld [vmem:[#allocation5 + $0x110] sm:$0xff]
    %v87 = vld [vmem:[#allocation5 + $0x118] sm:$0xff]
    %v88 = vld [vmem:[#allocation5 + $0x120] sm:$0xff]
    %v89 = vld [vmem:[#allocation5 + $0x128] sm:$0xff]
    %v90 = vld [vmem:[#allocation5 + $0x130] sm:$0xff]
    %v91 = vld [vmem:[#allocation5 + $0x138] sm:$0xff]
    %v92 = vld [vmem:[#allocation5 + $0x140] sm:$0xff]
    %v93 = vld [vmem:[#allocation5 + $0x148] sm:$0xff]
    %v94 = vld [vmem:[#allocation5 + $0x150] sm:$0xff]
    %v95 = vld [vmem:[#allocation5 + $0x158] sm:$0xff]
    %v96 = vld [vmem:[#allocation5 + $0x160] sm:$0xff]
    %v97 = vld [vmem:[#allocation5 + $0x168] sm:$0xff]
    %v98 = vld [vmem:[#allocation5 + $0x170] sm:$0xff]
    %v99 = vld [vmem:[#allocation5 + $0x178] sm:$0xff]
    %v100 = vld [vmem:[#allocation7] sm:$0xff]
    %v101 = vld [vmem:[#allocation2] sm:$0xff]
    %v102 = vlaneseq
    %v103 = vshrl.u32 %v102, 7
    %v104 = vsub.s32 0, %v103
    %v105 = vrot.slane %v100, %v104
    %106 = vmatprep.subr.mxu0 0.0
    %107 = vmatpush1.msra.mxu0 %v67
    %108 = vmatprep.subr.mxu0 0.0
    %109 = vmatpush1.msra.mxu0 %v66
    %110 = vmatprep.subr.mxu0 0.0
    %111 = vmatpush1.msra.mxu0 %v65
    %112 = vmatprep.subr.mxu0 0.0
    %113 = vmatpush1.msra.mxu0 %v64
    %114 = vmatprep.subr.mxu0 0.0
    %115 = vmatpush1.msra.mxu0 %v63
    %116 = vmatprep.subr.mxu0 0.0
    %117 = vmatpush1.msra.mxu0 %v62
    %118 = vmatprep.subr.mxu0 0.0
    %119 = vmatpush1.msra.mxu0 %v61
    %120 = vmatprep.subr.mxu0 0.0
    %121 = vmatpush1.msra.mxu0 %v60
    %122 = vmatprep.subr.mxu0 0.0
    %123 = vmatpush1.msra.mxu0 %v59
    %124 = vmatprep.subr.mxu0 0.0
    %125 = vmatpush1.msra.mxu0 %v58
    %126 = vmatprep.subr.mxu0 0.0
    %127 = vmatpush1.msra.mxu0 %v57
    %128 = vmatprep.subr.mxu0 0.0
    %129 = vmatpush1.msra.mxu0 %v56
    %130 = vmatprep.subr.mxu0 0.0
    %131 = vmatpush1.msra.mxu0 %v55
    %132 = vmatprep.subr.mxu0 0.0
    %133 = vmatpush1.msra.mxu0 %v54
    %134 = vmatprep.subr.mxu0 0.0
    %135 = vmatpush1.msra.mxu0 %v53
    %136 = vmatprep.subr.mxu0 0.0
    %137 = vmatpush1.msra.mxu0 %v52
    %138 = vmatprep.subr.mxu0 0.0
    %139 = vmatpush2.msra.mxu0 0.0
    %140 = vmatprep.subr.mxu0 0.0
    %141 = vmatpush2.msra.mxu0 0.0
    %142 = vmatprep.subr.mxu0 0.0
    %143 = vmatpush2.msra.mxu0 0.0
    %144 = vmatprep.subr.mxu0 0.0
    %145 = vmatpush2.msra.mxu0 0.0
    %146 = vmatprep.subr.mxu0 0.0
    %147 = vmatpush2.msra.mxu0 0.0
    %148 = vmatprep.subr.mxu0 0.0
    %149 = vmatpush2.msra.mxu0 0.0
    %150 = vmatprep.subr.mxu0 0.0
    %151 = vmatpush2.msra.mxu0 0.0
    %152 = vmatprep.subr.mxu0 0.0
    %153 = vmatpush2.msra.mxu0 0.0
    %154 = vmatprep.subr.mxu0 0.0
    %155 = vmatpush2.msra.mxu0 0.0
    %156 = vmatprep.subr.mxu0 0.0
    %157 = vmatpush2.msra.mxu0 0.0
    %158 = vmatprep.subr.mxu0 0.0
    %159 = vmatpush2.msra.mxu0 0.0
    %160 = vmatprep.subr.mxu0 0.0
    %161 = vmatpush2.msra.mxu0 0.0
    %162 = vmatprep.subr.mxu0 0.0
    %163 = vmatpush2.msra.mxu0 0.0
    %164 = vmatprep.subr.mxu0 0.0
    %165 = vmatpush2.msra.mxu0 0.0
    %166 = vmatprep.subr.mxu0 0.0
    %167 = vmatpush2.msra.mxu0 0.0
    %168 = vmatprep.subr.mxu0 0.0
    %169 = vmatpush2.msra.mxu0 0.0
    %170 = vmatprep.mubr.f32.mxu0 0.0
    %171 = vmatmul.mubr.f32.gmra.mxu0 %v101
    %v172 = vpop.f32.mrf.mxu0
    %v173 = vadd.f32 %v105, %v172
    %v174 = vpop.f32.mrf.mxu0
    %175 = vdwg.mxu0
    %v176 = vmax.f32 %v173, 0.0
    %v177 = vlaneseq
    %v178 = vshrl.u32 %v177, 7
    %v179 = vsub.s32 1, %v178
    %v180 = vrot.slane %v100, %v179
    %181 = vmatprep.subr.mxu0 0.0
    %182 = vmatpush1.msra.mxu0 %v83
    %183 = vmatprep.subr.mxu0 0.0
    %184 = vmatpush1.msra.mxu0 %v82
    %185 = vmatprep.subr.mxu0 0.0
    %186 = vmatpush1.msra.mxu0 %v81
    %187 = vmatprep.subr.mxu0 0.0
    %188 = vmatpush1.msra.mxu0 %v80
    %189 = vmatprep.subr.mxu0 0.0
    %190 = vmatpush1.msra.mxu0 %v79
    %191 = vmatprep.subr.mxu0 0.0
    %192 = vmatpush1.msra.mxu0 %v78
    %193 = vmatprep.subr.mxu0 0.0
    %194 = vmatpush1.msra.mxu0 %v77
    %195 = vmatprep.subr.mxu0 0.0
    %196 = vmatpush1.msra.mxu0 %v76
    %197 = vmatprep.subr.mxu0 0.0
    %198 = vmatpush1.msra.mxu0 %v75
    %199 = vmatprep.subr.mxu0 0.0
    %200 = vmatpush1.msra.mxu0 %v74
    %201 = vmatprep.subr.mxu0 0.0
    %202 = vmatpush1.msra.mxu0 %v73
    %203 = vmatprep.subr.mxu0 0.0
    %204 = vmatpush1.msra.mxu0 %v72
    %205 = vmatprep.subr.mxu0 0.0
    %206 = vmatpush1.msra.mxu0 %v71
    %207 = vmatprep.subr.mxu0 0.0
    %208 = vmatpush1.msra.mxu0 %v70
    %209 = vmatprep.subr.mxu0 0.0
    %210 = vmatpush1.msra.mxu0 %v69
    %211 = vmatprep.subr.mxu0 0.0
    %212 = vmatpush1.msra.mxu0 %v68
    %213 = vmatprep.subr.mxu0 0.0
    %214 = vmatpush2.msra.mxu0 0.0
    %215 = vmatprep.subr.mxu0 0.0
    %216 = vmatpush2.msra.mxu0 0.0
    %217 = vmatprep.subr.mxu0 0.0
    %218 = vmatpush2.msra.mxu0 0.0
    %219 = vmatprep.subr.mxu0 0.0
    %220 = vmatpush2.msra.mxu0 0.0
    %221 = vmatprep.subr.mxu0 0.0
    %222 = vmatpush2.msra.mxu0 0.0
    %223 = vmatprep.subr.mxu0 0.0
    %224 = vmatpush2.msra.mxu0 0.0
    %225 = vmatprep.subr.mxu0 0.0
    %226 = vmatpush2.msra.mxu0 0.0
    %227 = vmatprep.subr.mxu0 0.0
    %228 = vmatpush2.msra.mxu0 0.0
    %229 = vmatprep.subr.mxu0 0.0
    %230 = vmatpush2.msra.mxu0 0.0
    %231 = vmatprep.subr.mxu0 0.0
    %232 = vmatpush2.msra.mxu0 0.0
    %233 = vmatprep.subr.mxu0 0.0
    %234 = vmatpush2.msra.mxu0 0.0
    %235 = vmatprep.subr.mxu0 0.0
    %236 = vmatpush2.msra.mxu0 0.0
    %237 = vmatprep.subr.mxu0 0.0
    %238 = vmatpush2.msra.mxu0 0.0
    %239 = vmatprep.subr.mxu0 0.0
    %240 = vmatpush2.msra.mxu0 0.0
    %241 = vmatprep.subr.mxu0 0.0
    %242 = vmatpush2.msra.mxu0 0.0
    %243 = vmatprep.subr.mxu0 0.0
    %244 = vmatpush2.msra.mxu0 0.0
    %245 = vmatprep.mubr.f32.mxu0 0.0
    %246 = vmatmul.mubr.f32.gmra.mxu0 %v176
    %v247 = vpop.f32.mrf.mxu0
    %v248 = vadd.f32 %v180, %v247
    %v249 = vpop.f32.mrf.mxu0
    %250 = vdwg.mxu0
    %v251 = vmax.f32 %v248, 0.0
    %v252 = vlaneseq
    %v253 = vshrl.u32 %v252, 7
    %v254 = vsub.s32 2, %v253
    %v255 = vrot.slane %v100, %v254
    %256 = vmatprep.subr.mxu0 0.0
    %257 = vmatpush1.msra.mxu0 %v99
    %258 = vmatprep.subr.mxu0 0.0
    %259 = vmatpush1.msra.mxu0 %v98
    %260 = vmatprep.subr.mxu0 0.0
    %261 = vmatpush1.msra.mxu0 %v97
    %262 = vmatprep.subr.mxu0 0.0
    %263 = vmatpush1.msra.mxu0 %v96
    %264 = vmatprep.subr.mxu0 0.0
    %265 = vmatpush1.msra.mxu0 %v95
    %266 = vmatprep.subr.mxu0 0.0
    %267 = vmatpush1.msra.mxu0 %v94
    %268 = vmatprep.subr.mxu0 0.0
    %269 = vmatpush1.msra.mxu0 %v93
    %270 = vmatprep.subr.mxu0 0.0
    %271 = vmatpush1.msra.mxu0 %v92
    %272 = vmatprep.subr.mxu0 0.0
    %273 = vmatpush1.msra.mxu0 %v91
    %274 = vmatprep.subr.mxu0 0.0
    %275 = vmatpush1.msra.mxu0 %v90
    %276 = vmatprep.subr.mxu0 0.0
    %277 = vmatpush1.msra.mxu0 %v89
    %278 = vmatprep.subr.mxu0 0.0
    %279 = vmatpush1.msra.mxu0 %v88
    %280 = vmatprep.subr.mxu0 0.0
    %281 = vmatpush1.msra.mxu0 %v87
    %282 = vmatprep.subr.mxu0 0.0
    %283 = vmatpush1.msra.mxu0 %v86
    %284 = vmatprep.subr.mxu0 0.0
    %285 = vmatpush1.msra.mxu0 %v85
    %286 = vmatprep.subr.mxu0 0.0
    %287 = vmatpush1.msra.mxu0 %v84
    %288 = vmatprep.subr.mxu0 0.0
    %289 = vmatpush2.msra.mxu0 0.0
    %290 = vmatprep.subr.mxu0 0.0
    %291 = vmatpush2.msra.mxu0 0.0
    %292 = vmatprep.subr.mxu0 0.0
    %293 = vmatpush2.msra.mxu0 0.0
    %294 = vmatprep.subr.mxu0 0.0
    %295 = vmatpush2.msra.mxu0 0.0
    %296 = vmatprep.subr.mxu0 0.0
    %297 = vmatpush2.msra.mxu0 0.0
    %298 = vmatprep.subr.mxu0 0.0
    %299 = vmatpush2.msra.mxu0 0.0
    %300 = vmatprep.subr.mxu0 0.0
    %301 = vmatpush2.msra.mxu0 0.0
    %302 = vmatprep.subr.mxu0 0.0
    %303 = vmatpush2.msra.mxu0 0.0
    %304 = vmatprep.subr.mxu0 0.0
    %305 = vmatpush2.msra.mxu0 0.0
    %306 = vmatprep.subr.mxu0 0.0
    %307 = vmatpush2.msra.mxu0 0.0
    %308 = vmatprep.subr.mxu0 0.0
    %309 = vmatpush2.msra.mxu0 0.0
    %310 = vmatprep.subr.mxu0 0.0
    %311 = vmatpush2.msra.mxu0 0.0
    %312 = vmatprep.subr.mxu0 0.0
    %313 = vmatpush2.msra.mxu0 0.0
    %314 = vmatprep.subr.mxu0 0.0
    %315 = vmatpush2.msra.mxu0 0.0
    %316 = vmatprep.subr.mxu0 0.0
    %317 = vmatpush2.msra.mxu0 0.0
    %318 = vmatprep.subr.mxu0 0.0
    %319 = vmatpush2.msra.mxu0 0.0
    %320 = vmatprep.mubr.f32.mxu0 0.0
    %321 = vmatmul.mubr.f32.gmra.mxu0 %v251
    %v322 = vpop.f32.mrf.mxu0
    %v323 = vadd.f32 %v255, %v322
    %v324 = vpop.f32.mrf.mxu0
    %325 = vdwg.mxu0
    %v326 = vtanh.pop %v323
    %v327 = vmul.f32 %v326, 2.0
    %328 = vst [vmem:[#allocation8] sm:$0xff] %v327
    // Predicated region
    $region26: #{tpu_custom_call.1} parent=1 // pred_check
      _
    $region27: #{tpu_custom_call.1} parent=1 // pred_check_branch
      %330 = sbr.rel (0) target = $region29
    $region28: #{tpu_custom_call.1} parent=1 // pred_region
      %s332 = ssub.s32 128, 128
      %333 = vsyncadd [#allocation4], %s332
      %s335 = sshll.u32 [#allocation8], 4
      %s336 = int_to_ptr.vmem [resolvable:$true] %s335
      %338 = dma.vmem_to_hbm [thread:$0]  %s336, 128, %s3, [#allocation4]
    $region29: #{tpu_custom_call.1} parent=1 // pred_fallthru
      _
    // Predicated region
    $region30: #{tpu_custom_call.1} parent=1 // pred_check
      _
    $region31: #{tpu_custom_call.1} parent=1 // pred_check_branch
      %340 = sbr.rel (0) target = $region33
    $region32: #{tpu_custom_call.1} parent=1 // pred_region
      %341 = dma.done [#allocation4], 128
    $region33: #{tpu_custom_call.1} parent=1 // pred_fallthru
      _
    %342 = vsyncpa [#allocation3], 1
    %343 = vsyncpa [#allocation6], 1
    %344 = vsyncpa [#allocation4], 1

</llo_original>
